<compile_context>
chip_gen: v7x
topology: tpu7x:2x2x1
jax: 0.10.0
libtpu: 0.0.40
codegen_flags: <defaults>
</compile_context>

<pallas_src>
import math
import functools

import jax
import jax.numpy as jnp
from jax import lax
from jax.experimental import pallas as pl
from jax.experimental.pallas import tpu as pltpu


# 32 MiB scoped-VMEM request: above the v5e default (16 MiB), equal to the v7x default,
# safely below every chip's physical VMEM; per-block footprints here are far smaller.
VMEM_LIMIT = 32 * 1024 * 1024


# ----------------------------------------------------------------------------
# Tiling helpers
# ----------------------------------------------------------------------------
def _pick_tile(n, target=512):
    """Largest multiple-of-8 divisor of n that is <= target (falls back to full n)."""
    t = min(n, target)
    for cand in range(t, 7, -1):
        if n % cand == 0 and cand % 8 == 0:
            return cand
    return n


def _band_height(h, target=32):
    """Largest divisor of h that is <= target (row-band height for the dwconv)."""
    t = min(h, target)
    for cand in range(t, 0, -1):
        if h % cand == 0:
            return cand
    return h


# ----------------------------------------------------------------------------
# Kernels
# ----------------------------------------------------------------------------
def ln_matmul_kernel(x_ref, g_ref, b_ref, w_ref, o_ref):
    # x_ref: (TILE_M, Cin)  g/b: (1, Cin)  w: (Cin, Cout)  o: (TILE_M, Cout)
    x = x_ref[...].astype(jnp.float32)
    mu = jnp.mean(x, axis=-1, keepdims=True)
    var = jnp.mean((x - mu) ** 2, axis=-1, keepdims=True)          # unbiased=False
    xn = (x - mu) * lax.rsqrt(var + 1e-5)
    xn = xn * g_ref[...].astype(jnp.float32) + b_ref[...].astype(jnp.float32)
    o_ref[...] = jnp.dot(xn.astype(w_ref.dtype), w_ref[...],
                         preferred_element_type=jnp.float32).astype(o_ref.dtype)


def matmul_residual_kernel(x_ref, w_ref, r_ref, o_ref):
    # out = residual + x @ w   (project_out of the attention branch + skip connection)
    acc = jnp.dot(x_ref[...], w_ref[...], preferred_element_type=jnp.float32)
    o_ref[...] = (r_ref[...].astype(jnp.float32) + acc).astype(o_ref.dtype)


def gated_matmul_residual_kernel(y_ref, w_ref, r_ref, o_ref):
    # y_ref: (TILE_M, 2*hidden); gate = gelu(y1) * y2; out = residual + gate @ w_pout
    y = y_ref[...].astype(jnp.float32)
    h = y.shape[-1] // 2
    y1 = y[:, :h]
    y2 = y[:, h:]
    gate = 0.5 * y1 * (1.0 + lax.erf(y1 * (1.0 / math.sqrt(2.0)))) * y2   # exact GELU
    acc = jnp.dot(gate.astype(w_ref.dtype), w_ref[...],
                  preferred_element_type=jnp.float32)
    o_ref[...] = (r_ref[...].astype(jnp.float32) + acc).astype(o_ref.dtype)


def dwconv3_kernel(xp_ref, w_ref, o_ref):
    # xp_ref: (1, 1, bandH+2, W+2, C) padded+haloed band; w: (3, 3, C); o: (1, bandH, W, C)
    hb = o_ref.shape[1]
    wd = o_ref.shape[2]
    x = xp_ref[0, 0].astype(jnp.float32)            # load once, slice in-register
    w = w_ref[...].astype(jnp.float32)
    acc = jnp.zeros(o_ref.shape[1:], jnp.float32)   # (bandH, W, C)
    for dy in range(3):
        for dx in range(3):
            acc = acc + x[dy:dy + hb, dx:dx + wd, :] * w[dy, dx]
    o_ref[0] = acc.astype(o_ref.dtype)


def _softmax_lastdim(x):
    m = jnp.max(x, axis=-1, keepdims=True)
    e = jnp.exp(x - m)
    return e * pl.reciprocal(jnp.sum(e, axis=-1, keepdims=True), approx=True)


def attn_kernel(qkv_ref, t_ref, o_ref, *, num_heads):
    # qkv_ref: (1, HW, 3C)  t_ref: (NH,) in SMEM  o_ref: (1, HW, C)
    # Head split/merge happens in-register; q/k/v live as (HW, CH) so every matmul
    # contracts without transposing the large HW-sized operand.
    x = qkv_ref[0].astype(jnp.float32)              # (HW, 3C)
    c3 = x.shape[-1]
    c = c3 // 3
    ch = c // num_heads
    dn_hw = (((0,), (0,)), ((), ()))                # contract over HW (rows)
    dn_ch = (((1,), (1,)), ((), ()))                # contract over CH (cols)

    outs = []
    for h in range(num_heads):
        q = x[:, h * ch:(h + 1) * ch]
        k = x[:, c + h * ch: c + (h + 1) * ch]
        v = x[:, 2 * c + h * ch: 2 * c + (h + 1) * ch]

        # torch.nn.functional.normalize(dim=-1): x / max(||x||_2, 1e-12)
        qn = q * lax.rsqrt(jnp.maximum(jnp.sum(q * q, axis=0, keepdims=True), 1e-24))
        kn = k * lax.rsqrt(jnp.maximum(jnp.sum(k * k, axis=0, keepdims=True), 1e-24))

        temp = t_ref[h]
        # Dual-softmax attention exactly as in the reference module.
        attn = _softmax_lastdim(
            lax.dot_general(qn, kn, dn_hw, preferred_element_type=jnp.float32) * temp)
        attn1 = _softmax_lastdim(
            lax.dot_general(v, kn, dn_hw, preferred_element_type=jnp.float32) * temp)

        # out[hw, i] = sum_j attn1[i, j] * qn[hw, j] + sum_j attn[i, j] * v[hw, j]
        out_h = (lax.dot_general(qn, attn1, dn_ch, preferred_element_type=jnp.float32)
                 + lax.dot_general(v, attn, dn_ch, preferred_element_type=jnp.float32))
        outs.append(out_h)

    o_ref[0] = jnp.concatenate(outs, axis=-1).astype(o_ref.dtype)


# ----------------------------------------------------------------------------
# Pallas wrappers
# ----------------------------------------------------------------------------
def ln_matmul(x2d, gamma, beta, w, tile_target=512):
    N, cin = x2d.shape
    cout = w.shape[1]
    tm = _pick_tile(N, tile_target)
    return pl.pallas_call(
        ln_matmul_kernel,
        out_shape=jax.ShapeDtypeStruct((N, cout), x2d.dtype),
        grid=(pl.cdiv(N, tm),),
        in_specs=[
            pl.BlockSpec((tm, cin), lambda i: (i, 0)),
            pl.BlockSpec((1, cin), lambda i: (0, 0)),
            pl.BlockSpec((1, cin), lambda i: (0, 0)),
            pl.BlockSpec((cin, cout), lambda i: (0, 0)),
        ],
        out_specs=pl.BlockSpec((tm, cout), lambda i: (i, 0)),
        compiler_params=pltpu.CompilerParams(
            dimension_semantics=("parallel",), vmem_limit_bytes=VMEM_LIMIT),
    )(x2d, gamma.reshape(1, cin), beta.reshape(1, cin), w)


def matmul_residual(x2d, w, res2d, tile_target=512):
    N, cin = x2d.shape
    cout = w.shape[1]
    tm = _pick_tile(N, tile_target)
    return pl.pallas_call(
        matmul_residual_kernel,
        out_shape=jax.ShapeDtypeStruct((N, cout), res2d.dtype),
        grid=(pl.cdiv(N, tm),),
        in_specs=[
            pl.BlockSpec((tm, cin), lambda i: (i, 0)),
            pl.BlockSpec((cin, cout), lambda i: (0, 0)),
            pl.BlockSpec((tm, cout), lambda i: (i, 0)),
        ],
        out_specs=pl.BlockSpec((tm, cout), lambda i: (i, 0)),
        compiler_params=pltpu.CompilerParams(
            dimension_semantics=("parallel",), vmem_limit_bytes=VMEM_LIMIT),
    )(x2d, w, res2d)


def gated_matmul_residual(y2d, w, res2d, tile_target=512):
    N, c2h = y2d.shape
    hidden = c2h // 2
    cout = w.shape[1]
    assert w.shape[0] == hidden
    tm = _pick_tile(N, tile_target)
    return pl.pallas_call(
        gated_matmul_residual_kernel,
        out_shape=jax.ShapeDtypeStruct((N, cout), res2d.dtype),
        grid=(pl.cdiv(N, tm),),
        in_specs=[
            pl.BlockSpec((tm, c2h), lambda i: (i, 0)),
            pl.BlockSpec((hidden, cout), lambda i: (0, 0)),
            pl.BlockSpec((tm, cout), lambda i: (i, 0)),
        ],
        out_specs=pl.BlockSpec((tm, cout), lambda i: (i, 0)),
        compiler_params=pltpu.CompilerParams(
            dimension_semantics=("parallel",), vmem_limit_bytes=VMEM_LIMIT),
    )(y2d, w, res2d)


def dwconv3x3(x, w, band_target=32):
    # x: (B, H, W, C), w: (3, 3, C) — stride 1, padding 1, groups=C.
    B, H, W, C = x.shape
    band = _band_height(H, band_target)
    nb = H // band
    xp = jnp.pad(x, ((0, 0), (1, 1), (1, 1), (0, 0)))
    # Materialize overlapping row bands (2-row halo duplicated per band) so every
    # Pallas block is a plain non-overlapping block -> clean pipelining + TC sharding.
    bands = jnp.stack(
        [lax.slice_in_dim(xp, b * band, b * band + band + 2, axis=1) for b in range(nb)],
        axis=1)                                      # (B, nb, band+2, W+2, C)
    return pl.pallas_call(
        dwconv3_kernel,
        out_shape=jax.ShapeDtypeStruct((B, H, W, C), x.dtype),
        grid=(B, nb),
        in_specs=[
            pl.BlockSpec((1, 1, band + 2, W + 2, C), lambda b, j: (b, j, 0, 0, 0)),
            pl.BlockSpec((3, 3, C), lambda b, j: (0, 0, 0)),
        ],
        out_specs=pl.BlockSpec((1, band, W, C), lambda b, j: (b, j, 0, 0)),
        compiler_params=pltpu.CompilerParams(
            dimension_semantics=("parallel", "parallel"), vmem_limit_bytes=VMEM_LIMIT),
    )(bands, w)


def attention_core(qkv3d, temperature, num_heads):
    # qkv3d: (B, HW, 3C); temperature: (num_heads,) scalars (SMEM).
    B, HW, C3 = qkv3d.shape
    C = C3 // 3
    kernel = functools.partial(attn_kernel, num_heads=num_heads)
    # TODO(synk): for very large HW the (HW, 3C) block should be flash-tiled over HW;
    # at typical Restormer shapes it fits VMEM as a single block per batch element.
    return pl.pallas_call(
        kernel,
        out_shape=jax.ShapeDtypeStruct((B, HW, C), qkv3d.dtype),
        grid=(B,),
        in_specs=[
            pl.BlockSpec((1, HW, C3), lambda b: (b, 0, 0)),
            pl.BlockSpec(memory_space=pltpu.MemorySpace.SMEM),
        ],
        out_specs=pl.BlockSpec((1, HW, C), lambda b: (b, 0, 0)),
        compiler_params=pltpu.CompilerParams(
            dimension_semantics=("parallel",), vmem_limit_bytes=VMEM_LIMIT),
    )(qkv3d, temperature.reshape(num_heads).astype(jnp.float32))


# ----------------------------------------------------------------------------
# TransformerBlock forward
# ----------------------------------------------------------------------------
def transformer_block(x_nchw, params):
    B, C, H, W = x_nchw.shape
    HW = H * W
    NH = params["num_heads"]

    # NCHW -> flattened channels-last rows (B*HW, C)
    x = jnp.transpose(x_nchw, (0, 2, 3, 1)).reshape(B * HW, C)

    # ---------------- Attention branch: x = x + proj(attn(dwconv(qkv(norm1(x))))) -----
    qkv = ln_matmul(x, params["ln1_w"], params["ln1_b"], params["w_qkv"])     # (B*HW, 3C)
    qkv = dwconv3x3(qkv.reshape(B, H, W, 3 * C), params["w_qkv_dw"])          # (B,H,W,3C)
    att = attention_core(qkv.reshape(B, HW, 3 * C), params["temperature"], NH)  # (B,HW,C)
    x = matmul_residual(att.reshape(B * HW, C), params["w_proj"], x)          # (B*HW, C)

    # ---------------- FFN branch: x = x + pout(gelu-gate(dwconv(pin(norm2(x))))) ------
    y = ln_matmul(x, params["ln2_w"], params["ln2_b"], params["w_pin"])       # (B*HW, 2h)
    y = dwconv3x3(y.reshape(B, H, W, -1), params["w_ffn_dw"])                 # (B,H,W,2h)
    x = gated_matmul_residual(y.reshape(B * HW, -1), params["w_pout"], x)     # (B*HW, C)

    return jnp.transpose(x.reshape(B, H, W, C), (0, 3, 1, 2))                 # -> NCHW


# ----------------------------------------------------------------------------
# Deterministic parameter construction (mirrors module __init__ shapes, bias=False)
# ----------------------------------------------------------------------------
def make_params(key, dim, num_heads, ffn_expansion_factor):
    hidden = int(dim * ffn_expansion_factor)
    ks = jax.random.split(key, 6)
    scale = 0.02
    return {
        "num_heads": num_heads,
        # LayerNorm (WithBias): weight=ones, bias=zeros
        "ln1_w": jnp.ones((dim,), jnp.float32),
        "ln1_b": jnp.zeros((dim,), jnp.float32),
        "ln2_w": jnp.ones((dim,), jnp.float32),
        "ln2_b": jnp.zeros((dim,), jnp.float32),
        # Attention: 1x1 convs stored as (Cin, Cout); depthwise as (3, 3, C)
        "w_qkv": scale * jax.random.normal(ks[0], (dim, 3 * dim), jnp.float32),
        "w_qkv_dw": scale * jax.random.normal(ks[1], (3, 3, 3 * dim), jnp.float32),
        "w_proj": scale * jax.random.normal(ks[2], (dim, dim), jnp.float32),
        "temperature": jnp.ones((num_heads, 1, 1), jnp.float32),
        # FeedForward
        "w_pin": scale * jax.random.normal(ks[3], (dim, 2 * hidden), jnp.float32),
        "w_ffn_dw": scale * jax.random.normal(ks[4], (3, 3, 2 * hidden), jnp.float32),
        "w_pout": scale * jax.random.normal(ks[5], (hidden, dim), jnp.float32),
    }


if __name__ == "__main__":
    # TransformerBlock(dim=16, num_heads=2, ffn_expansion_factor=2, bias=False,
    #                  LayerNorm_type='WithBias'); input NCHW.
    B, C, H, W = 2, 16, 8, 8
    num_heads = 2
    ffn_expansion_factor = 2

    key = jax.random.PRNGKey(0)
    k_x, k_p = jax.random.split(key)
    x = jax.random.normal(k_x, (B, C, H, W), jnp.float32)
    params = make_params(k_p, C, num_heads, ffn_expansion_factor)

    out = transformer_block(x, params)
    jax.block_until_ready(out)
    assert out.shape == (B, C, H, W) and out.dtype == jnp.float32
    print("KERNEL_OK")
</pallas_src>

<mosaic_0001>
module attributes {stable_mosaic.version = 11 : i64} {
  func.func @ln_matmul_kernel(%arg0: i32, %arg1: memref<128x16xf32, #tpu.memory_space<vmem>>, %arg2: memref<1x16xf32, #tpu.memory_space<vmem>>, %arg3: memref<1x16xf32, #tpu.memory_space<vmem>>, %arg4: memref<16x48xf32, #tpu.memory_space<vmem>>, %arg5: memref<128x48xf32, #tpu.memory_space<vmem>>) attributes {dimension_semantics = [#tpu.dimension_semantics<parallel>], iteration_bounds = array<i64: 1>, scalar_prefetch = 0 : i64, scratch_operands = 0 : i64, tpu.core_type = #tpu.core_type<tc>, window_params = [{transform_indices = @transform_0, window_bounds = array<i64: 128, 16>}, {pipeline_mode = #tpu.pipeline_mode<synchronous>, transform_indices = @transform_1, window_bounds = array<i64: 1, 16>}, {pipeline_mode = #tpu.pipeline_mode<synchronous>, transform_indices = @transform_2, window_bounds = array<i64: 1, 16>}, {pipeline_mode = #tpu.pipeline_mode<synchronous>, transform_indices = @transform_3, window_bounds = array<i64: 16, 48>}, {transform_indices = @transform_4, window_bounds = array<i64: 128, 48>}]} {
    %c0 = arith.constant 0 : index
    %c0_0 = arith.constant 0 : index
    %0 = vector.load %arg1[%c0, %c0_0] : memref<128x16xf32, #tpu.memory_space<vmem>>, vector<128x16xf32>
    %cst = arith.constant dense<0.000000e+00> : vector<128xf32>
    %1 = vector.multi_reduction <add>, %0, %cst [1] : vector<128x16xf32> to vector<128xf32>
    %2 = vector.shape_cast %1 : vector<128xf32> to vector<128x1xf32>
    %cst_1 = arith.constant 1.600000e+01 : f32
    %3 = vector.broadcast %cst_1 : f32 to vector<128x1xf32>
    %4 = arith.divf %2, %3 : vector<128x1xf32>
    %5 = vector.broadcast %4 : vector<128x1xf32> to vector<128x16xf32>
    %6 = arith.subf %0, %5 : vector<128x16xf32>
    %7 = arith.mulf %6, %6 : vector<128x16xf32>
    %cst_2 = arith.constant dense<0.000000e+00> : vector<128xf32>
    %8 = vector.multi_reduction <add>, %7, %cst_2 [1] : vector<128x16xf32> to vector<128xf32>
    %9 = vector.shape_cast %8 : vector<128xf32> to vector<128x1xf32>
    %cst_3 = arith.constant 1.600000e+01 : f32
    %10 = vector.broadcast %cst_3 : f32 to vector<128x1xf32>
    %11 = arith.divf %9, %10 : vector<128x1xf32>
    %12 = vector.broadcast %4 : vector<128x1xf32> to vector<128x16xf32>
    %13 = arith.subf %0, %12 : vector<128x16xf32>
    %cst_4 = arith.constant 9.99999974E-6 : f32
    %14 = vector.broadcast %cst_4 : f32 to vector<128x1xf32>
    %15 = arith.addf %11, %14 : vector<128x1xf32>
    %16 = math.rsqrt %15 : vector<128x1xf32>
    %17 = vector.broadcast %16 : vector<128x1xf32> to vector<128x16xf32>
    %18 = arith.mulf %13, %17 : vector<128x16xf32>
    %c0_5 = arith.constant 0 : index
    %c0_6 = arith.constant 0 : index
    %19 = vector.load %arg2[%c0_5, %c0_6] : memref<1x16xf32, #tpu.memory_space<vmem>>, vector<1x16xf32>
    %20 = vector.broadcast %19 : vector<1x16xf32> to vector<128x16xf32>
    %21 = arith.mulf %18, %20 : vector<128x16xf32>
    %c0_7 = arith.constant 0 : index
    %c0_8 = arith.constant 0 : index
    %22 = vector.load %arg3[%c0_7, %c0_8] : memref<1x16xf32, #tpu.memory_space<vmem>>, vector<1x16xf32>
    %23 = vector.broadcast %22 : vector<1x16xf32> to vector<128x16xf32>
    %24 = arith.addf %21, %23 : vector<128x16xf32>
    %c0_9 = arith.constant 0 : index
    %c0_10 = arith.constant 0 : index
    %25 = vector.load %arg4[%c0_9, %c0_10] : memref<16x48xf32, #tpu.memory_space<vmem>>, vector<16x48xf32>
    %cst_11 = arith.constant dense<0.000000e+00> : vector<128x48xf32>
    %26 = tpu.matmul %24, %25, %cst_11 {dimension_numbers = #tpu.dot_dimension_numbers<[1], [0], [0], [1], [0, 0, 1, 1], [], []>} : vector<128x16xf32>, vector<16x48xf32>, vector<128x48xf32> -> vector<128x48xf32>
    %c0_12 = arith.constant 0 : index
    %c0_13 = arith.constant 0 : index
    %27 = vector.load %arg5[%c0_12, %c0_13] : memref<128x48xf32, #tpu.memory_space<vmem>>, vector<128x48xf32>
    tpu.vector_store %arg5[%c0_12, %c0_13], %26 {strides = array<i32>} : memref<128x48xf32, #tpu.memory_space<vmem>>, vector<128x48xf32>,
    return
  }
  func.func @transform_0(%arg0: i32) -> (i32, i32) {
    %c0_i32 = arith.constant 0 : i32
    %c0_i32_0 = arith.constant 0 : i32
    return %arg0, %c0_i32 : i32, i32
  }
  func.func @transform_1(%arg0: i32) -> (i32, i32) {
    %c0_i32 = arith.constant 0 : i32
    %c0_i32_0 = arith.constant 0 : i32
    %c0_i32_1 = arith.constant 0 : i32
    return %c0_i32, %c0_i32_0 : i32, i32
  }
  func.func @transform_2(%arg0: i32) -> (i32, i32) {
    %c0_i32 = arith.constant 0 : i32
    %c0_i32_0 = arith.constant 0 : i32
    %c0_i32_1 = arith.constant 0 : i32
    return %c0_i32, %c0_i32_0 : i32, i32
  }
  func.func @transform_3(%arg0: i32) -> (i32, i32) {
    %c0_i32 = arith.constant 0 : i32
    %c0_i32_0 = arith.constant 0 : i32
    %c0_i32_1 = arith.constant 0 : i32
    return %c0_i32, %c0_i32_0 : i32, i32
  }
  func.func @transform_4(%arg0: i32) -> (i32, i32) {
    %c0_i32 = arith.constant 0 : i32
    %c0_i32_0 = arith.constant 0 : i32
    return %arg0, %c0_i32 : i32, i32
  }
}

</mosaic_0001>

<llo_original>
// kernel: tpu_custom_call.1
$region0: #{tpu_custom_call.1}
  #allocation0 [shape = 'u32[]', space=smem, size = 0x4, offset = 0x4, fixed_abs, tag = 'smem constant byte address 0x4 - core index']
  #allocation1 [shape = 'u32[144,128]{1,0:T(1,128)}', space=vmem, size = 0x12000, scoped, tag = 'internal scratch']
  %s0 = inlined_call_operand.vmem [shape: f32[128,16], index: 0, kind: input, shape index: {}]
  %s1 = inlined_call_operand.vmem [shape: f32[1,16], index: 1, kind: input, shape index: {}]
  %s2 = inlined_call_operand.vmem [shape: f32[1,16], index: 2, kind: input, shape index: {}]
  %s3 = inlined_call_operand.vmem [shape: f32[16,48], index: 3, kind: input, shape index: {}]
  %s4 = inlined_call_operand.vmem [shape: f32[128,48], index: 4, kind: output, shape index: {}]
  %s5 = sld [smem:[#allocation0]]
  $region26: #{tpu_custom_call.1} parent=0
    _
  %s7 = ssub.s32 1, %s5
  %s8 = scalar_select 0, %s7, %s5
  // Predicated region
  $region2: #{tpu_custom_call.1} parent=0 // pred_check
    _
  $region3: #{tpu_custom_call.1} parent=0 // pred_check_branch
    %10 = sbr.rel (0) target = $region5
  $region4: #{tpu_custom_call.1} parent=0 // pred_region
    _
  $region5: #{tpu_custom_call.1} parent=0 // pred_fallthru
    _
  // Predicated region
  $region6: #{tpu_custom_call.1} parent=0 // pred_check
    _
  $region7: #{tpu_custom_call.1} parent=0 // pred_check_branch
    %12 = sbr.rel (0) target = $region9
  $region8: #{tpu_custom_call.1} parent=0 // pred_region
    _
  $region9: #{tpu_custom_call.1} parent=0 // pred_fallthru
    _
  // Predicated region
  $region10: #{tpu_custom_call.1} parent=0 // pred_check
    _
  $region11: #{tpu_custom_call.1} parent=0 // pred_check_branch
    %14 = sbr.rel (0) target = $region13
  $region12: #{tpu_custom_call.1} parent=0 // pred_region
    _
  $region13: #{tpu_custom_call.1} parent=0 // pred_fallthru
    _
  // Predicated region
  $region14: #{tpu_custom_call.1} parent=0 // pred_check
    _
  $region15: #{tpu_custom_call.1} parent=0 // pred_check_branch
    %16 = sbr.rel (0) target = $region17
  $region16: #{tpu_custom_call.1} parent=0 // pred_region
    _
  $region17: #{tpu_custom_call.1} parent=0 // pred_fallthru
    _
  %v17 = vld [vmem:[%s0] sm:$0xff]
  %v18 = vld [vmem:[%s0 + $0x8] sm:$0xff]
  %v19 = vld [vmem:[%s0 + $0x10] sm:$0xff]
  %v20 = vld [vmem:[%s0 + $0x18] sm:$0xff]
  %v21 = vld [vmem:[%s0 + $0x20] sm:$0xff]
  %v22 = vld [vmem:[%s0 + $0x28] sm:$0xff]
  %v23 = vld [vmem:[%s0 + $0x30] sm:$0xff]
  %v24 = vld [vmem:[%s0 + $0x38] sm:$0xff]
  %v25 = vld [vmem:[%s0 + $0x40] sm:$0xff]
  %v26 = vld [vmem:[%s0 + $0x48] sm:$0xff]
  %v27 = vld [vmem:[%s0 + $0x50] sm:$0xff]
  %v28 = vld [vmem:[%s0 + $0x58] sm:$0xff]
  %v29 = vld [vmem:[%s0 + $0x60] sm:$0xff]
  %v30 = vld [vmem:[%s0 + $0x68] sm:$0xff]
  %v31 = vld [vmem:[%s0 + $0x70] sm:$0xff]
  %v32 = vld [vmem:[%s0 + $0x78] sm:$0xff]
  %vm33 = vcmask 130048
  %v34 = vsel %vm33, %v17, 0.0
  %35 = vadd.xlane.f32.xlu0 %v34
  %v36 = vpop.xlane.xlu0 %35
  %v37 = vsel %vm33, %v18, 0.0
  %38 = vadd.xlane.f32.xlu0 %v37
  %v39 = vpop.xlane.xlu0 %38
  %v40 = vsel %vm33, %v19, 0.0
  %41 = vadd.xlane.f32.xlu0 %v40
  %v42 = vpop.xlane.xlu0 %41
  %v43 = vsel %vm33, %v20, 0.0
  %44 = vadd.xlane.f32.xlu0 %v43
  %v45 = vpop.xlane.xlu0 %44
  %v46 = vsel %vm33, %v21, 0.0
  %47 = vadd.xlane.f32.xlu0 %v46
  %v48 = vpop.xlane.xlu0 %47
  %v49 = vsel %vm33, %v22, 0.0
  %50 = vadd.xlane.f32.xlu0 %v49
  %v51 = vpop.xlane.xlu0 %50
  %v52 = vsel %vm33, %v23, 0.0
  %53 = vadd.xlane.f32.xlu0 %v52
  %v54 = vpop.xlane.xlu0 %53
  %v55 = vsel %vm33, %v24, 0.0
  %56 = vadd.xlane.f32.xlu0 %v55
  %v57 = vpop.xlane.xlu0 %56
  %v58 = vsel %vm33, %v25, 0.0
  %59 = vadd.xlane.f32.xlu0 %v58
  %v60 = vpop.xlane.xlu0 %59
  %v61 = vsel %vm33, %v26, 0.0
  %62 = vadd.xlane.f32.xlu0 %v61
  %v63 = vpop.xlane.xlu0 %62
  %v64 = vsel %vm33, %v27, 0.0
  %65 = vadd.xlane.f32.xlu0 %v64
  %v66 = vpop.xlane.xlu0 %65
  %v67 = vsel %vm33, %v28, 0.0
  %68 = vadd.xlane.f32.xlu0 %v67
  %v69 = vpop.xlane.xlu0 %68
  %v70 = vsel %vm33, %v29, 0.0
  %71 = vadd.xlane.f32.xlu0 %v70
  %v72 = vpop.xlane.xlu0 %71
  %v73 = vsel %vm33, %v30, 0.0
  %74 = vadd.xlane.f32.xlu0 %v73
  %v75 = vpop.xlane.xlu0 %74
  %v76 = vsel %vm33, %v31, 0.0
  %77 = vadd.xlane.f32.xlu0 %v76
  %v78 = vpop.xlane.xlu0 %77
  %v79 = vsel %vm33, %v32, 0.0
  %80 = vadd.xlane.f32.xlu0 %v79
  %v81 = vpop.xlane.xlu0 %80
  %v82 = vrcp.pop 16.0
  %v83 = vmul.f32 %v36, %v82
  %v84 = vmul.f32 %v39, %v82
  %v85 = vmul.f32 %v42, %v82
  %v86 = vmul.f32 %v45, %v82
  %v87 = vmul.f32 %v48, %v82
  %v88 = vmul.f32 %v51, %v82
  %v89 = vmul.f32 %v54, %v82
  %v90 = vmul.f32 %v57, %v82
  %v91 = vmul.f32 %v60, %v82
  %v92 = vmul.f32 %v63, %v82
  %v93 = vmul.f32 %v66, %v82
  %v94 = vmul.f32 %v69, %v82
  %v95 = vmul.f32 %v72, %v82
  %v96 = vmul.f32 %v75, %v82
  %v97 = vmul.f32 %v78, %v82
  %v98 = vmul.f32 %v81, %v82
  %v99 = vsub.f32 %v17, %v83
  %v100 = vsub.f32 %v18, %v84
  %v101 = vsub.f32 %v19, %v85
  %v102 = vsub.f32 %v20, %v86
  %v103 = vsub.f32 %v21, %v87
  %v104 = vsub.f32 %v22, %v88
  %v105 = vsub.f32 %v23, %v89
  %v106 = vsub.f32 %v24, %v90
  %v107 = vsub.f32 %v25, %v91
  %v108 = vsub.f32 %v26, %v92
  %v109 = vsub.f32 %v27, %v93
  %v110 = vsub.f32 %v28, %v94
  %v111 = vsub.f32 %v29, %v95
  %v112 = vsub.f32 %v30, %v96
  %v113 = vsub.f32 %v31, %v97
  %v114 = vsub.f32 %v32, %v98
  %v115 = vmul.f32 %v99, %v99
  %v116 = vmul.f32 %v100, %v100
  %v117 = vmul.f32 %v101, %v101
  %v118 = vmul.f32 %v102, %v102
  %v119 = vmul.f32 %v103, %v103
  %v120 = vmul.f32 %v104, %v104
  %v121 = vmul.f32 %v105, %v105
  %v122 = vmul.f32 %v106, %v106
  %v123 = vmul.f32 %v107, %v107
  %v124 = vmul.f32 %v108, %v108
  %v125 = vmul.f32 %v109, %v109
  %v126 = vmul.f32 %v110, %v110
  %v127 = vmul.f32 %v111, %v111
  %v128 = vmul.f32 %v112, %v112
  %v129 = vmul.f32 %v113, %v113
  %v130 = vmul.f32 %v114, %v114
  %v131 = vsel %vm33, %v115, 0.0
  %132 = vadd.xlane.f32.xlu0 %v131
  %v133 = vpop.xlane.xlu0 %132
  %v134 = vsel %vm33, %v116, 0.0
  %135 = vadd.xlane.f32.xlu0 %v134
  %v136 = vpop.xlane.xlu0 %135
  %v137 = vsel %vm33, %v117, 0.0
  %138 = vadd.xlane.f32.xlu0 %v137
  %v139 = vpop.xlane.xlu0 %138
  %v140 = vsel %vm33, %v118, 0.0
  %141 = vadd.xlane.f32.xlu0 %v140
  %v142 = vpop.xlane.xlu0 %141
  %v143 = vsel %vm33, %v119, 0.0
  %144 = vadd.xlane.f32.xlu0 %v143
  %v145 = vpop.xlane.xlu0 %144
  %v146 = vsel %vm33, %v120, 0.0
  %147 = vadd.xlane.f32.xlu0 %v146
  %v148 = vpop.xlane.xlu0 %147
  %v149 = vsel %vm33, %v121, 0.0
  %150 = vadd.xlane.f32.xlu0 %v149
  %v151 = vpop.xlane.xlu0 %150
  %v152 = vsel %vm33, %v122, 0.0
  %153 = vadd.xlane.f32.xlu0 %v152
  %v154 = vpop.xlane.xlu0 %153
  %v155 = vsel %vm33, %v123, 0.0
  %156 = vadd.xlane.f32.xlu0 %v155
  %v157 = vpop.xlane.xlu0 %156
  %v158 = vsel %vm33, %v124, 0.0
  %159 = vadd.xlane.f32.xlu0 %v158
  %v160 = vpop.xlane.xlu0 %159
  %v161 = vsel %vm33, %v125, 0.0
  %162 = vadd.xlane.f32.xlu0 %v161
  %v163 = vpop.xlane.xlu0 %162
  %v164 = vsel %vm33, %v126, 0.0
  %165 = vadd.xlane.f32.xlu0 %v164
  %v166 = vpop.xlane.xlu0 %165
  %v167 = vsel %vm33, %v127, 0.0
  %168 = vadd.xlane.f32.xlu0 %v167
  %v169 = vpop.xlane.xlu0 %168
  %v170 = vsel %vm33, %v128, 0.0
  %171 = vadd.xlane.f32.xlu0 %v170
  %v172 = vpop.xlane.xlu0 %171
  %v173 = vsel %vm33, %v129, 0.0
  %174 = vadd.xlane.f32.xlu0 %v173
  %v175 = vpop.xlane.xlu0 %174
  %v176 = vsel %vm33, %v130, 0.0
  %177 = vadd.xlane.f32.xlu0 %v176
  %v178 = vpop.xlane.xlu0 %177
  %v179 = vmul.f32 %v133, %v82
  %v180 = vmul.f32 %v136, %v82
  %v181 = vmul.f32 %v139, %v82
  %v182 = vmul.f32 %v142, %v82
  %v183 = vmul.f32 %v145, %v82
  %v184 = vmul.f32 %v148, %v82
  %v185 = vmul.f32 %v151, %v82
  %v186 = vmul.f32 %v154, %v82
  %v187 = vmul.f32 %v157, %v82
  %v188 = vmul.f32 %v160, %v82
  %v189 = vmul.f32 %v163, %v82
  %v190 = vmul.f32 %v166, %v82
  %v191 = vmul.f32 %v169, %v82
  %v192 = vmul.f32 %v172, %v82
  %v193 = vmul.f32 %v175, %v82
  %v194 = vmul.f32 %v178, %v82
  %v195 = vadd.f32 %v179, 1e-05
  %v196 = vadd.f32 %v180, 1e-05
  %v197 = vadd.f32 %v181, 1e-05
  %v198 = vadd.f32 %v182, 1e-05
  %v199 = vadd.f32 %v183, 1e-05
  %v200 = vadd.f32 %v184, 1e-05
  %v201 = vadd.f32 %v185, 1e-05
  %v202 = vadd.f32 %v186, 1e-05
  %v203 = vadd.f32 %v187, 1e-05
  %v204 = vadd.f32 %v188, 1e-05
  %v205 = vadd.f32 %v189, 1e-05
  %v206 = vadd.f32 %v190, 1e-05
  %v207 = vadd.f32 %v191, 1e-05
  %v208 = vadd.f32 %v192, 1e-05
  %v209 = vadd.f32 %v193, 1e-05
  %v210 = vadd.f32 %v194, 1e-05
  %v211 = vrsqrt.pop %v195
  %v212 = vrsqrt.pop %v196
  %v213 = vrsqrt.pop %v197
  %v214 = vrsqrt.pop %v198
  %v215 = vrsqrt.pop %v199
  %v216 = vrsqrt.pop %v200
  %v217 = vrsqrt.pop %v201
  %v218 = vrsqrt.pop %v202
  %v219 = vrsqrt.pop %v203
  %v220 = vrsqrt.pop %v204
  %v221 = vrsqrt.pop %v205
  %v222 = vrsqrt.pop %v206
  %v223 = vrsqrt.pop %v207
  %v224 = vrsqrt.pop %v208
  %v225 = vrsqrt.pop %v209
  %v226 = vrsqrt.pop %v210
  %v227 = vmul.f32 %v99, %v211
  %v228 = vmul.f32 %v100, %v212
  %v229 = vmul.f32 %v101, %v213
  %v230 = vmul.f32 %v102, %v214
  %v231 = vmul.f32 %v103, %v215
  %v232 = vmul.f32 %v104, %v216
  %v233 = vmul.f32 %v105, %v217
  %v234 = vmul.f32 %v106, %v218
  %v235 = vmul.f32 %v107, %v219
  %v236 = vmul.f32 %v108, %v220
  %v237 = vmul.f32 %v109, %v221
  %v238 = vmul.f32 %v110, %v222
  %v239 = vmul.f32 %v111, %v223
  %v240 = vmul.f32 %v112, %v224
  %v241 = vmul.f32 %v113, %v225
  %v242 = vmul.f32 %v114, %v226
  %v243 = vld [vmem:[%s1] sm:$0x1]
  %v245 = vlaneseq
  %v246 = vshrl.u32 %v245, 7
  %v247 = vsub.s32 0, %v246
  %v248 = vrot.slane %v243, %v247
  %v250 = vmul.f32 %v227, %v248
  %v251 = vmul.f32 %v228, %v248
  %v252 = vmul.f32 %v229, %v248
  %v253 = vmul.f32 %v230, %v248
  %v254 = vmul.f32 %v231, %v248
  %v255 = vmul.f32 %v232, %v248
  %v256 = vmul.f32 %v233, %v248
  %v257 = vmul.f32 %v234, %v248
  %v258 = vmul.f32 %v235, %v248
  %v259 = vmul.f32 %v236, %v248
  %v260 = vmul.f32 %v237, %v248
  %v261 = vmul.f32 %v238, %v248
  %v262 = vmul.f32 %v239, %v248
  %v263 = vmul.f32 %v240, %v248
  %v264 = vmul.f32 %v241, %v248
  %v265 = vmul.f32 %v242, %v248
  %v266 = vld [vmem:[%s2] sm:$0x1]
  %v268 = vlaneseq
  %v269 = vshrl.u32 %v268, 7
  %v270 = vsub.s32 0, %v269
  %v271 = vrot.slane %v266, %v270
  %v273 = vadd.f32 %v250, %v271
  %v274 = vadd.f32 %v251, %v271
  %v275 = vadd.f32 %v252, %v271
  %v276 = vadd.f32 %v253, %v271
  %v277 = vadd.f32 %v254, %v271
  %v278 = vadd.f32 %v255, %v271
  %v279 = vadd.f32 %v256, %v271
  %v280 = vadd.f32 %v257, %v271
  %v281 = vadd.f32 %v258, %v271
  %v282 = vadd.f32 %v259, %v271
  %v283 = vadd.f32 %v260, %v271
  %v284 = vadd.f32 %v261, %v271
  %v285 = vadd.f32 %v262, %v271
  %v286 = vadd.f32 %v263, %v271
  %v287 = vadd.f32 %v264, %v271
  %v288 = vadd.f32 %v265, %v271
  %v289 = vld [vmem:[%s3] sm:$0xff]
  %v290 = vld [vmem:[%s3 + $0x8] sm:$0xff]
  %v292 = vsel %vm33, %v273, 0
  %v295 = vsel %vm33, %v274, 0
  %v298 = vsel %vm33, %v275, 0
  %v301 = vsel %vm33, %v276, 0
  %v304 = vsel %vm33, %v277, 0
  %v307 = vsel %vm33, %v278, 0
  %v310 = vsel %vm33, %v279, 0
  %v313 = vsel %vm33, %v280, 0
  %v316 = vsel %vm33, %v281, 0
  %v319 = vsel %vm33, %v282, 0
  %v322 = vsel %vm33, %v283, 0
  %v325 = vsel %vm33, %v284, 0
  %v328 = vsel %vm33, %v285, 0
  %v331 = vsel %vm33, %v286, 0
  %v334 = vsel %vm33, %v287, 0
  %v337 = vsel %vm33, %v288, 0
  %339 = vmatprep.subr.mxu0 0.0
  %340 = vmatpush1.msra.mxu0 %v289
  %341 = vmatprep.subr.mxu0 0.0
  %342 = vmatpush1.msra.mxu0 %v290
  %343 = vmatprep.subr.mxu0 0.0
  %344 = vmatpush1.msra.mxu0 0.0
  %345 = vmatprep.subr.mxu0 0.0
  %346 = vmatpush1.msra.mxu0 0.0
  %347 = vmatprep.subr.mxu0 0.0
  %348 = vmatpush1.msra.mxu0 0.0
  %349 = vmatprep.subr.mxu0 0.0
  %350 = vmatpush1.msra.mxu0 0.0
  %351 = vmatprep.subr.mxu0 0.0
  %352 = vmatpush1.msra.mxu0 0.0
  %353 = vmatprep.subr.mxu0 0.0
  %354 = vmatpush1.msra.mxu0 0.0
  %355 = vmatprep.subr.mxu0 0.0
  %356 = vmatpush1.msra.mxu0 0.0
  %357 = vmatprep.subr.mxu0 0.0
  %358 = vmatpush1.msra.mxu0 0.0
  %359 = vmatprep.subr.mxu0 0.0
  %360 = vmatpush1.msra.mxu0 0.0
  %361 = vmatprep.subr.mxu0 0.0
  %362 = vmatpush1.msra.mxu0 0.0
  %363 = vmatprep.subr.mxu0 0.0
  %364 = vmatpush1.msra.mxu0 0.0
  %365 = vmatprep.subr.mxu0 0.0
  %366 = vmatpush1.msra.mxu0 0.0
  %367 = vmatprep.subr.mxu0 0.0
  %368 = vmatpush1.msra.mxu0 0.0
  %369 = vmatprep.subr.mxu0 0.0
  %370 = vmatpush1.msra.mxu0 0.0
  %371 = vmatprep.subr.mxu0 0.0
  %372 = vmatpush1.msra.mxu0 0.0
  %373 = vmatprep.subr.mxu0 0.0
  %374 = vmatpush1.msra.mxu0 0.0
  %375 = vmatprep.subr.mxu0 0.0
  %376 = vmatpush1.msra.mxu0 0.0
  %377 = vmatprep.subr.mxu0 0.0
  %378 = vmatpush1.msra.mxu0 0.0
  %379 = vmatprep.subr.mxu0 0.0
  %380 = vmatpush1.msra.mxu0 0.0
  %381 = vmatprep.subr.mxu0 0.0
  %382 = vmatpush1.msra.mxu0 0.0
  %383 = vmatprep.subr.mxu0 0.0
  %384 = vmatpush1.msra.mxu0 0.0
  %385 = vmatprep.subr.mxu0 0.0
  %386 = vmatpush1.msra.mxu0 0.0
  %387 = vmatprep.subr.mxu0 0.0
  %388 = vmatpush1.msra.mxu0 0.0
  %389 = vmatprep.subr.mxu0 0.0
  %390 = vmatpush1.msra.mxu0 0.0
  %391 = vmatprep.subr.mxu0 0.0
  %392 = vmatpush1.msra.mxu0 0.0
  %393 = vmatprep.subr.mxu0 0.0
  %394 = vmatpush1.msra.mxu0 0.0
  %395 = vmatprep.subr.mxu0 0.0
  %396 = vmatpush1.msra.mxu0 0.0
  %397 = vmatprep.subr.mxu0 0.0
  %398 = vmatpush1.msra.mxu0 0.0
  %399 = vmatprep.subr.mxu0 0.0
  %400 = vmatpush1.msra.mxu0 0.0
  %401 = vmatprep.subr.mxu0 0.0
  %402 = vmatpush1.msra.mxu0 0.0
  %403 = vmatprep.mubr.f32.mxu0 0.0
  %404 = vmatmul.mubr.f32.gmra.mrb[0].mxu0 %v292
  %v405 = vpop.f32.mrb[0].mxu0
  %v406 = vadd.f32 0.0, %v405
  %v407 = vpop.f32.mrb[0].mxu0
  %408 = vmatprep.mubr.f32.mxu0 0.0
  %409 = vmatmul.mubr.f32.gmra.mrb[0].mxu0 %v295
  %v410 = vpop.f32.mrb[0].mxu0
  %v411 = vadd.f32 0.0, %v410
  %v412 = vpop.f32.mrb[0].mxu0
  %413 = vmatprep.mubr.f32.mxu0 0.0
  %414 = vmatmul.mubr.f32.gmra.mrb[0].mxu0 %v298
  %v415 = vpop.f32.mrb[0].mxu0
  %v416 = vadd.f32 0.0, %v415
  %v417 = vpop.f32.mrb[0].mxu0
  %418 = vmatprep.mubr.f32.mxu0 0.0
  %419 = vmatmul.mubr.f32.gmra.mrb[0].mxu0 %v301
  %v420 = vpop.f32.mrb[0].mxu0
  %v421 = vadd.f32 0.0, %v420
  %v422 = vpop.f32.mrb[0].mxu0
  %423 = vmatprep.mubr.f32.mxu0 0.0
  %424 = vmatmul.mubr.f32.gmra.mrb[0].mxu0 %v304
  %v425 = vpop.f32.mrb[0].mxu0
  %v426 = vadd.f32 0.0, %v425
  %v427 = vpop.f32.mrb[0].mxu0
  %428 = vmatprep.mubr.f32.mxu0 0.0
  %429 = vmatmul.mubr.f32.gmra.mrb[0].mxu0 %v307
  %v430 = vpop.f32.mrb[0].mxu0
  %v431 = vadd.f32 0.0, %v430
  %v432 = vpop.f32.mrb[0].mxu0
  %433 = vmatprep.mubr.f32.mxu0 0.0
  %434 = vmatmul.mubr.f32.gmra.mrb[0].mxu0 %v310
  %v435 = vpop.f32.mrb[0].mxu0
  %v436 = vadd.f32 0.0, %v435
  %v437 = vpop.f32.mrb[0].mxu0
  %438 = vmatprep.mubr.f32.mxu0 0.0
  %439 = vmatmul.mubr.f32.gmra.mrb[0].mxu0 %v313
  %v440 = vpop.f32.mrb[0].mxu0
  %v441 = vadd.f32 0.0, %v440
  %v442 = vpop.f32.mrb[0].mxu0
  %443 = vmatprep.mubr.f32.mxu0 0.0
  %444 = vmatmul.mubr.f32.gmra.mrb[0].mxu0 %v316
  %v445 = vpop.f32.mrb[0].mxu0
  %v446 = vadd.f32 0.0, %v445
  %v447 = vpop.f32.mrb[0].mxu0
  %448 = vmatprep.mubr.f32.mxu0 0.0
  %449 = vmatmul.mubr.f32.gmra.mrb[0].mxu0 %v319
  %v450 = vpop.f32.mrb[0].mxu0
  %v451 = vadd.f32 0.0, %v450
  %v452 = vpop.f32.mrb[0].mxu0
  %453 = vmatprep.mubr.f32.mxu0 0.0
  %454 = vmatmul.mubr.f32.gmra.mrb[0].mxu0 %v322
  %v455 = vpop.f32.mrb[0].mxu0
  %v456 = vadd.f32 0.0, %v455
  %v457 = vpop.f32.mrb[0].mxu0
  %458 = vmatprep.mubr.f32.mxu0 0.0
  %459 = vmatmul.mubr.f32.gmra.mrb[0].mxu0 %v325
  %v460 = vpop.f32.mrb[0].mxu0
  %v461 = vadd.f32 0.0, %v460
  %v462 = vpop.f32.mrb[0].mxu0
  %463 = vmatprep.mubr.f32.mxu0 0.0
  %464 = vmatmul.mubr.f32.gmra.mrb[0].mxu0 %v328
  %v465 = vpop.f32.mrb[0].mxu0
  %v466 = vadd.f32 0.0, %v465
  %v467 = vpop.f32.mrb[0].mxu0
  %468 = vmatprep.mubr.f32.mxu0 0.0
  %469 = vmatmul.mubr.f32.gmra.mrb[0].mxu0 %v331
  %v470 = vpop.f32.mrb[0].mxu0
  %v471 = vadd.f32 0.0, %v470
  %v472 = vpop.f32.mrb[0].mxu0
  %473 = vmatprep.mubr.f32.mxu0 0.0
  %474 = vmatmul.mubr.f32.gmra.mrb[0].mxu0 %v334
  %v475 = vpop.f32.mrb[0].mxu0
  %v476 = vadd.f32 0.0, %v475
  %v477 = vpop.f32.mrb[0].mxu0
  %478 = vmatprep.mubr.f32.mxu0 0.0
  %479 = vmatmul.mubr.f32.gmra.mrb[0].mxu0 %v337
  %v480 = vpop.f32.mrb[0].mxu0
  %v481 = vadd.f32 0.0, %v480
  %v482 = vpop.f32.mrb[0].mxu0
  %483 = vdwg.mxu0
  %vm484 = vcmask 392192
  %485 = vst.msk [vmem:[%s4] sm:$0xff] %vm484, %v406
  %486 = vst.msk [vmem:[%s4 + $0x8] sm:$0xff] %vm484, %v411
  %487 = vst.msk [vmem:[%s4 + $0x10] sm:$0xff] %vm484, %v416
  %488 = vst.msk [vmem:[%s4 + $0x18] sm:$0xff] %vm484, %v421
  %489 = vst.msk [vmem:[%s4 + $0x20] sm:$0xff] %vm484, %v426
  %490 = vst.msk [vmem:[%s4 + $0x28] sm:$0xff] %vm484, %v431
  %491 = vst.msk [vmem:[%s4 + $0x30] sm:$0xff] %vm484, %v436
  %492 = vst.msk [vmem:[%s4 + $0x38] sm:$0xff] %vm484, %v441
  %493 = vst.msk [vmem:[%s4 + $0x40] sm:$0xff] %vm484, %v446
  %494 = vst.msk [vmem:[%s4 + $0x48] sm:$0xff] %vm484, %v451
  %495 = vst.msk [vmem:[%s4 + $0x50] sm:$0xff] %vm484, %v456
  %496 = vst.msk [vmem:[%s4 + $0x58] sm:$0xff] %vm484, %v461
  %497 = vst.msk [vmem:[%s4 + $0x60] sm:$0xff] %vm484, %v466
  %498 = vst.msk [vmem:[%s4 + $0x68] sm:$0xff] %vm484, %v471
  %499 = vst.msk [vmem:[%s4 + $0x70] sm:$0xff] %vm484, %v476
  %500 = vst.msk [vmem:[%s4 + $0x78] sm:$0xff] %vm484, %v481
  // Predicated region
  $region18: #{tpu_custom_call.1} parent=0 // pred_check
    _
  $region19: #{tpu_custom_call.1} parent=0 // pred_check_branch
    %502 = sbr.rel (0) target = $region21
  $region20: #{tpu_custom_call.1} parent=0 // pred_region
    _
  $region21: #{tpu_custom_call.1} parent=0 // pred_fallthru
    _
  // Predicated region
  $region22: #{tpu_custom_call.1} parent=0 // pred_check
    _
  $region23: #{tpu_custom_call.1} parent=0 // pred_check_branch
    %504 = sbr.rel (0) target = $region25
  $region24: #{tpu_custom_call.1} parent=0 // pred_region
    _
  $region25: #{tpu_custom_call.1} parent=0 // pred_fallthru
    _

</llo_original>
